<compile_context>
chip_gen: v6e
topology: v6e:2x2x1
jax: 0.10.0
libtpu: 0.0.40
codegen_flags: <defaults>
</compile_context>

<pallas_src>
import functools

import jax
import jax.numpy as jnp
from jax.experimental import pallas as pl
from jax.experimental.pallas import tpu as pltpu

# ----- module-consistent config ----------------------------------------------
VOCA_SIZE = 50       # voca_size (V)
INPUT_SIZE = 16      # input_size (embedding dim D)
BILSTM_HIDDEN = 32   # bilstm_hidden_size (H)
FFNN_HIDDEN = 32     # ffnn_hidden_size (Fh)
FFNN_OUTPUT = 4      # ffnn_output_size (classes C)
SEQ_LEN = 8          # max sentence length S
BATCH = 2            # batch size B

OUT_PAD = 128        # lane-dense output width (C padded to 128)
NEG_INF = -1e30      # logit pad so padded classes vanish in log-softmax

# ----- packed bf16 weight-slab layout: (160, 192), 16-row aligned blocks -----
W_COLS = 6 * BILSTM_HIDDEN   # 192 lanes
ROW_WF = 0                   # rows [0:50)    W_fused = emb_table @ gate_W  (V, 6H)
ROW_W1 = 64                  # rows [64:128)  FFNN W1 (2H, Fh)
ROW_W2 = 128                 # rows [128:160) FFNN W2 (Fh, OUT_PAD) zero-padded
W_ROWS = 160

# ----- tiny f32 bias slab: (8, 192) -------------------------------------------
BIAS_GATES = 0               # row 0: fused gate bias (b_ih + b_hh folded), 6H wide
BIAS_B1 = 1                  # row 1: FFNN b1, Fh wide
BIAS_B2 = 2                  # row 2: FFNN b2 padded with NEG_INF out to OUT_PAD
B_ROWS = 8


def bow_bilstm_kernel(ids_ref, wts_ref, w_ref, b_ref, out_ref):
    H, Fh, V = BILSTM_HIDDEN, FFNN_HIDDEN, VOCA_SIZE
    GW = 6 * H                                   # 192
    bt, s = ids_ref.shape                        # batch tile, seq len (static)

    ids = ids_ref[...]                           # (BT, S) int32 token ids
    wts = wts_ref[...]                           # (BT, S) f32 mask * (1/len)

    # ---- EmbeddingBag(mean) folded into the gate matmul ----------------------
    # counts[b, v] = sum_s (ids[b,s]==v) * wts[b,s]  -> weighted BoW counts.
    vocab = jax.lax.broadcasted_iota(jnp.int32, (bt, s, V), 2)
    counts = jnp.sum(
        jnp.where(ids[:, :, None] == vocab, wts[:, :, None], 0.0), axis=1)  # (BT, V) f32

    # ---- single-timestep BiLSTM, h0 = c0 = 0 ---------------------------------
    # PyTorch gate order is (i, f, g, o); f is dead since c = f*c0 + i*g and
    # c0 == 0.  Offline fold: W_fused = emb_table @ [i_f|i_b|g_f|g_b|o_f|o_b],
    # so gates = counts @ W_fused directly and h == concat(h_f, h_b).
    wf = w_ref[ROW_WF:ROW_WF + V, 0:GW]                                      # (V, 6H) bf16
    bg = b_ref[BIAS_GATES:BIAS_GATES + 1, 0:GW]                              # (1, 6H) f32
    gates = jnp.dot(counts.astype(jnp.bfloat16), wf,
                    preferred_element_type=jnp.float32) + bg                 # (BT, 6H) f32
    i = jax.nn.sigmoid(gates[:, 0:2 * H])
    g = jnp.tanh(gates[:, 2 * H:4 * H])
    o = jax.nn.sigmoid(gates[:, 4 * H:6 * H])
    h = o * jnp.tanh(i * g)                                                  # (BT, 2H) f32

    # ---- FFNN: Linear -> ReLU -> Linear (C padded to 128 lanes) --------------
    w1 = w_ref[ROW_W1:ROW_W1 + 2 * H, 0:Fh]                                  # (2H, Fh) bf16
    b1 = b_ref[BIAS_B1:BIAS_B1 + 1, 0:Fh]                                    # (1, Fh)  f32
    z1 = jnp.maximum(
        jnp.dot(h.astype(jnp.bfloat16), w1, preferred_element_type=jnp.float32) + b1,
        0.0)                                                                 # (BT, Fh)
    w2 = w_ref[ROW_W2:ROW_W2 + Fh, 0:OUT_PAD]                                # (Fh, 128) bf16
    b2 = b_ref[BIAS_B2:BIAS_B2 + 1, 0:OUT_PAD]                               # (1, 128)  f32
    z2 = jnp.dot(z1.astype(jnp.bfloat16), w2,
                 preferred_element_type=jnp.float32) + b2                    # (BT, 128)

    # ---- LogSoftmax(dim=1); padded lanes carry -1e30 so exp() -> 0 -----------
    m = jnp.max(z2, axis=1, keepdims=True)
    lse = jnp.log(jnp.sum(jnp.exp(z2 - m), axis=1, keepdims=True)) + m
    out_ref[...] = z2 - lse                                                  # lane-dense store


def init_params(key):
    D, H, Fh, Fo, V = INPUT_SIZE, BILSTM_HIDDEN, FFNN_HIDDEN, FFNN_OUTPUT, VOCA_SIZE
    ks = jax.random.split(key, 12)

    def u(k, shape, scale):
        return jax.random.uniform(k, shape, jnp.float32, -scale, scale)

    # nn.EmbeddingBag default init: N(0, 1)
    emb_table = jax.random.normal(ks[0], (V, D), jnp.float32)

    # nn.LSTM init: U(-1/sqrt(H), 1/sqrt(H)); bias = b_ih + b_hh (folded).
    s = 1.0 / jnp.sqrt(jnp.float32(H))
    w_f = u(ks[1], (4, D, H), s)                    # gate order (i, f, g, o)
    b_f = u(ks[2], (4, 1, H), s) + u(ks[3], (4, 1, H), s)
    w_b = u(ks[4], (4, D, H), s)
    b_b = u(ks[5], (4, 1, H), s) + u(ks[6], (4, 1, H), s)

    # FFNN linear layers: U(-1/sqrt(fan_in), 1/sqrt(fan_in))
    s1 = 1.0 / jnp.sqrt(jnp.float32(2 * H))
    w1 = u(ks[7], (2 * H, Fh), s1)
    b1 = u(ks[8], (1, Fh), s1)
    s2 = 1.0 / jnp.sqrt(jnp.float32(Fh))
    w2 = u(ks[9], (Fh, Fo), s2)
    b2 = u(ks[10], (1, Fo), s2)
    return (emb_table, w_f, b_f, w_b, b_b, w1, b1, w2, b2)


def pack_params(raw):
    """Pack weights into one (160, 192) bf16 slab + one (8, 192) f32 bias slab."""
    emb_table, w_f, b_f, w_b, b_b, w1, b1, w2, b2 = raw
    H = BILSTM_HIDDEN

    # fused gate layout [i_f | i_b | g_f | g_b | o_f | o_b]; forget gate dropped (c0 == 0)
    wg = jnp.concatenate([w_f[0], w_b[0], w_f[2], w_b[2], w_f[3], w_b[3]], axis=1)  # (D, 6H)
    bg = jnp.concatenate([b_f[0], b_b[0], b_f[2], b_b[2], b_f[3], b_b[3]], axis=1)  # (1, 6H)
    # Fold EmbeddingBag table into the gate matmul: counts @ (table @ wg)
    w_fused = jnp.matmul(emb_table, wg, precision=jax.lax.Precision.HIGHEST)        # (V, 6H)

    wslab = jnp.zeros((W_ROWS, W_COLS), jnp.float32)
    wslab = wslab.at[ROW_WF:ROW_WF + VOCA_SIZE, 0:6 * H].set(w_fused)
    wslab = wslab.at[ROW_W1:ROW_W1 + 2 * H, 0:FFNN_HIDDEN].set(w1)
    wslab = wslab.at[ROW_W2:ROW_W2 + FFNN_HIDDEN, 0:FFNN_OUTPUT].set(w2)
    wslab = wslab.astype(jnp.bfloat16)

    bslab = jnp.zeros((B_ROWS, W_COLS), jnp.float32)
    bslab = bslab.at[BIAS_GATES, 0:6 * H].set(bg[0])
    bslab = bslab.at[BIAS_B1, 0:FFNN_HIDDEN].set(b1[0])
    bslab = bslab.at[BIAS_B2, 0:OUT_PAD].set(NEG_INF)
    bslab = bslab.at[BIAS_B2, 0:FFNN_OUTPUT].set(b2[0])
    return wslab, bslab


@functools.partial(jax.jit, static_argnames=("batch_tile",))
def bow_bilstm_forward(tokens, lengths, wslab, bslab, batch_tile=None):
    """tokens: (S, B) int32 token ids; lengths: (B,) int32 valid lengths."""
    S, B = tokens.shape
    ids = tokens.T                                                   # (B, S) int32
    # Guard length==0 (PyTorch mean-EmbeddingBag of an empty bag is zeros).
    safe_len = jnp.maximum(lengths, 1).astype(jnp.float32)
    mask = (jnp.arange(S)[None, :] < lengths[:, None]).astype(jnp.float32)
    wts = mask / safe_len[:, None]                                   # 1/len folded into mask

    # Batch blocking: default = one big block (best on single-TC v5e/v6e);
    # pass batch_tile (e.g. 256-512) at large serving batches so the parallel
    # grid axis shards across v7x's two TensorCores.
    if batch_tile is None:
        batch_tile = B
    batch_tile = max(8, ((batch_tile + 7) // 8) * 8)
    bp = ((B + batch_tile - 1) // batch_tile) * batch_tile

    ids_p = jnp.zeros((bp, S), jnp.int32).at[:B].set(ids)
    wts_p = jnp.zeros((bp, S), jnp.float32).at[:B].set(wts)

    out = pl.pallas_call(
        bow_bilstm_kernel,
        out_shape=jax.ShapeDtypeStruct((bp, OUT_PAD), jnp.float32),
        grid=(bp // batch_tile,),
        in_specs=[
            pl.BlockSpec((batch_tile, S), lambda b: (b, 0)),         # int32 token ids
            pl.BlockSpec((batch_tile, S), lambda b: (b, 0)),         # mean weights
            pl.BlockSpec((W_ROWS, W_COLS), lambda b: (0, 0)),        # bf16 weights (resident)
            pl.BlockSpec((B_ROWS, W_COLS), lambda b: (0, 0)),        # f32 biases  (resident)
        ],
        out_specs=pl.BlockSpec((batch_tile, OUT_PAD), lambda b: (b, 0)),
        compiler_params=pltpu.CompilerParams(dimension_semantics=("parallel",)),
    )(ids_p, wts_p, wslab, bslab)
    return out[:B, :FFNN_OUTPUT]


def reference_forward(tokens, lengths, raw):
    """Pure-JAX reference (same math, f32, no Pallas) for validation."""
    emb_table, w_f, b_f, w_b, b_b, w1, b1, w2, b2 = raw
    ids = tokens.T
    emb = jnp.take(emb_table, ids, axis=0)                           # (B, S, D)
    mask = (jnp.arange(SEQ_LEN)[None, :] < lengths[:, None]).astype(jnp.float32)[:, :, None]
    vec = jnp.sum(emb * mask, axis=1) / jnp.maximum(lengths, 1).astype(jnp.float32)[:, None]

    def step(w, b):
        i = jax.nn.sigmoid(vec @ w[0] + b[0])
        g = jnp.tanh(vec @ w[2] + b[2])
        o = jax.nn.sigmoid(vec @ w[3] + b[3])
        return o * jnp.tanh(i * g)

    h = jnp.concatenate([step(w_f, b_f), step(w_b, b_b)], axis=1)
    z1 = jnp.maximum(h @ w1 + b1, 0.0)
    z2 = z1 @ w2 + b2
    return jax.nn.log_softmax(z2, axis=1)


if __name__ == "__main__":
    key = jax.random.PRNGKey(0)
    k_param, k_tok = jax.random.split(key)

    raw_params = init_params(k_param)
    wslab, bslab = pack_params(raw_params)

    # tokens: (S, B) int32, lengths: (B,) with 1 <= length <= S
    tokens = jax.random.randint(k_tok, (SEQ_LEN, BATCH), 0, VOCA_SIZE, dtype=jnp.int32)
    lengths = jnp.array([SEQ_LEN, 5], dtype=jnp.int32)

    out = bow_bilstm_forward(tokens, lengths, wslab, bslab)
    jax.block_until_ready(out)

    assert out.shape == (BATCH, FFNN_OUTPUT)
    # rows of log_softmax should exp-sum to 1 (padded lanes contribute 0)
    assert jnp.allclose(jnp.sum(jnp.exp(out), axis=1), 1.0, atol=1e-4)
    # match the pure-JAX f32 reference (tolerance covers bf16 weight slab + MXU bf16 passes)
    ref = reference_forward(tokens, lengths, raw_params)
    assert jnp.allclose(out, ref, atol=3e-2, rtol=3e-2)
    print("KERNEL_OK")
</pallas_src>

<mosaic_0001>
module attributes {stable_mosaic.version = 11 : i64} {
  func.func @bow_bilstm_kernel(%arg0: i32, %arg1: memref<8x8xi32, #tpu.memory_space<vmem>>, %arg2: memref<8x8xf32, #tpu.memory_space<vmem>>, %arg3: memref<160x192xbf16, #tpu.memory_space<vmem>>, %arg4: memref<8x192xf32, #tpu.memory_space<vmem>>, %arg5: memref<8x128xf32, #tpu.memory_space<vmem>>) attributes {dimension_semantics = [#tpu.dimension_semantics<parallel>], iteration_bounds = array<i64: 1>, scalar_prefetch = 0 : i64, scratch_operands = 0 : i64, tpu.core_type = #tpu.core_type<tc>, window_params = [{transform_indices = @transform_0, window_bounds = array<i64: 8, 8>}, {transform_indices = @transform_1, window_bounds = array<i64: 8, 8>}, {pipeline_mode = #tpu.pipeline_mode<synchronous>, transform_indices = @transform_2, window_bounds = array<i64: 160, 192>}, {pipeline_mode = #tpu.pipeline_mode<synchronous>, transform_indices = @transform_3, window_bounds = array<i64: 8, 192>}, {transform_indices = @transform_4, window_bounds = array<i64: 8, 128>}]} {
    %c0 = arith.constant 0 : index
    %c0_0 = arith.constant 0 : index
    %0 = vector.load %arg1[%c0, %c0_0] : memref<8x8xi32, #tpu.memory_space<vmem>>, vector<8x8xi32>
    %c0_1 = arith.constant 0 : index
    %c0_2 = arith.constant 0 : index
    %1 = vector.load %arg2[%c0_1, %c0_2] : memref<8x8xf32, #tpu.memory_space<vmem>>, vector<8x8xf32>
    %2 = tpu.iota {dimensions = array<i32: 2>} : vector<8x8x50xi32>
    %3 = vector.shape_cast %0 : vector<8x8xi32> to vector<8x8x1xi32>
    %4 = vector.broadcast %3 : vector<8x8x1xi32> to vector<8x8x50xi32>
    %5 = arith.cmpi eq, %4, %2 : vector<8x8x50xi32>
    %6 = vector.shape_cast %1 : vector<8x8xf32> to vector<8x8x1xf32>
    %cst = arith.constant 0.000000e+00 : f32
    %7 = vector.shape_cast %6 : vector<8x8x1xf32> to vector<8x8x1xf32>
    %8 = vector.broadcast %7 : vector<8x8x1xf32> to vector<8x8x50xf32>
    %9 = vector.broadcast %cst : f32 to vector<8x8x50xf32>
    %10 = arith.select %5, %8, %9 : vector<8x8x50xi1>, vector<8x8x50xf32>
    %cst_3 = arith.constant dense<0.000000e+00> : vector<8x50xf32>
    %11 = vector.multi_reduction <add>, %10, %cst_3 [1] : vector<8x8x50xf32> to vector<8x50xf32>
    %c0_4 = arith.constant 0 : index
    %c0_5 = arith.constant 0 : index
    %12 = vector.load %arg3[%c0_4, %c0_5] : memref<160x192xbf16, #tpu.memory_space<vmem>>, vector<50x192xbf16>
    %c0_6 = arith.constant 0 : index
    %c0_7 = arith.constant 0 : index
    %13 = vector.load %arg4[%c0_6, %c0_7] : memref<8x192xf32, #tpu.memory_space<vmem>>, vector<1x192xf32>
    %14 = arith.truncf %11 : vector<8x50xf32> to vector<8x50xbf16>
    %cst_8 = arith.constant dense<0.000000e+00> : vector<8x192xf32>
    %15 = tpu.matmul %14, %12, %cst_8 {dimension_numbers = #tpu.dot_dimension_numbers<[1], [0], [0], [1], [0, 0, 1, 1], [], []>} : vector<8x50xbf16>, vector<50x192xbf16>, vector<8x192xf32> -> vector<8x192xf32>
    %16 = vector.broadcast %13 : vector<1x192xf32> to vector<8x192xf32>
    %17 = arith.addf %15, %16 : vector<8x192xf32>
    %18 = vector.extract_strided_slice %17 {offsets = [0, 0], sizes = [8, 64], strides = [1, 1]} : vector<8x192xf32> to vector<8x64xf32>
    %19 = arith.negf %18 : vector<8x64xf32>
    %20 = math.exp %19 : vector<8x64xf32>
    %cst_9 = arith.constant 1.000000e+00 : f32
    %21 = vector.broadcast %cst_9 : f32 to vector<8x64xf32>
    %22 = arith.addf %21, %20 : vector<8x64xf32>
    %23 = arith.divf %21, %22 : vector<8x64xf32>
    %24 = vector.extract_strided_slice %17 {offsets = [0, 64], sizes = [8, 64], strides = [1, 1]} : vector<8x192xf32> to vector<8x64xf32>
    %25 = math.tanh %24 : vector<8x64xf32>
    %26 = vector.extract_strided_slice %17 {offsets = [0, 128], sizes = [8, 64], strides = [1, 1]} : vector<8x192xf32> to vector<8x64xf32>
    %27 = arith.negf %26 : vector<8x64xf32>
    %28 = math.exp %27 : vector<8x64xf32>
    %cst_10 = arith.constant 1.000000e+00 : f32
    %29 = vector.broadcast %cst_10 : f32 to vector<8x64xf32>
    %30 = arith.addf %29, %28 : vector<8x64xf32>
    %31 = arith.divf %29, %30 : vector<8x64xf32>
    %32 = arith.mulf %23, %25 : vector<8x64xf32>
    %33 = math.tanh %32 : vector<8x64xf32>
    %34 = arith.mulf %31, %33 : vector<8x64xf32>
    %c64 = arith.constant 64 : index
    %c0_11 = arith.constant 0 : index
    %35 = vector.load %arg3[%c64, %c0_11] : memref<160x192xbf16, #tpu.memory_space<vmem>>, vector<64x32xbf16>
    %c1 = arith.constant 1 : index
    %c0_12 = arith.constant 0 : index
    %36 = vector.load %arg4[%c1, %c0_12] : memref<8x192xf32, #tpu.memory_space<vmem>>, vector<1x32xf32>
    %37 = arith.truncf %34 : vector<8x64xf32> to vector<8x64xbf16>
    %cst_13 = arith.constant dense<0.000000e+00> : vector<8x32xf32>
    %38 = tpu.matmul %37, %35, %cst_13 {dimension_numbers = #tpu.dot_dimension_numbers<[1], [0], [0], [1], [0, 0, 1, 1], [], []>} : vector<8x64xbf16>, vector<64x32xbf16>, vector<8x32xf32> -> vector<8x32xf32>
    %39 = vector.broadcast %36 : vector<1x32xf32> to vector<8x32xf32>
    %40 = arith.addf %38, %39 : vector<8x32xf32>
    %cst_14 = arith.constant 0.000000e+00 : f32
    %41 = vector.broadcast %cst_14 : f32 to vector<8x32xf32>
    %42 = arith.maximumf %40, %41 : vector<8x32xf32>
    %c128 = arith.constant 128 : index
    %c0_15 = arith.constant 0 : index
    %43 = vector.load %arg3[%c128, %c0_15] : memref<160x192xbf16, #tpu.memory_space<vmem>>, vector<32x128xbf16>
    %c2 = arith.constant 2 : index
    %c0_16 = arith.constant 0 : index
    %44 = vector.load %arg4[%c2, %c0_16] : memref<8x192xf32, #tpu.memory_space<vmem>>, vector<1x128xf32>
    %45 = arith.truncf %42 : vector<8x32xf32> to vector<8x32xbf16>
    %cst_17 = arith.constant dense<0.000000e+00> : vector<8x128xf32>
    %46 = tpu.matmul %45, %43, %cst_17 {dimension_numbers = #tpu.dot_dimension_numbers<[1], [0], [0], [1], [0, 0, 1, 1], [], []>} : vector<8x32xbf16>, vector<32x128xbf16>, vector<8x128xf32> -> vector<8x128xf32>
    %47 = vector.broadcast %44 : vector<1x128xf32> to vector<8x128xf32>
    %48 = arith.addf %46, %47 : vector<8x128xf32>
    %cst_18 = arith.constant dense<0xFF800000> : vector<8xf32>
    %49 = vector.multi_reduction <maximumf>, %48, %cst_18 [1] : vector<8x128xf32> to vector<8xf32>
    %50 = vector.shape_cast %49 : vector<8xf32> to vector<8x1xf32>
    %51 = vector.broadcast %50 : vector<8x1xf32> to vector<8x128xf32>
    %52 = arith.subf %48, %51 : vector<8x128xf32>
    %53 = math.exp %52 : vector<8x128xf32>
    %cst_19 = arith.constant dense<0.000000e+00> : vector<8xf32>
    %54 = vector.multi_reduction <add>, %53, %cst_19 [1] : vector<8x128xf32> to vector<8xf32>
    %55 = vector.shape_cast %54 : vector<8xf32> to vector<8x1xf32>
    %56 = math.log %55 : vector<8x1xf32>
    %57 = arith.addf %56, %50 : vector<8x1xf32>
    %58 = vector.broadcast %57 : vector<8x1xf32> to vector<8x128xf32>
    %59 = arith.subf %48, %58 : vector<8x128xf32>
    %c0_20 = arith.constant 0 : index
    %c0_21 = arith.constant 0 : index
    %60 = vector.load %arg5[%c0_20, %c0_21] : memref<8x128xf32, #tpu.memory_space<vmem>>, vector<8x128xf32>
    tpu.vector_store %arg5[%c0_20, %c0_21], %59 {strides = array<i32>} : memref<8x128xf32, #tpu.memory_space<vmem>>, vector<8x128xf32>,
    return
  }
  func.func @transform_0(%arg0: i32) -> (i32, i32) {
    %c0_i32 = arith.constant 0 : i32
    %c0_i32_0 = arith.constant 0 : i32
    return %arg0, %c0_i32 : i32, i32
  }
  func.func @transform_1(%arg0: i32) -> (i32, i32) {
    %c0_i32 = arith.constant 0 : i32
    %c0_i32_0 = arith.constant 0 : i32
    return %arg0, %c0_i32 : i32, i32
  }
  func.func @transform_2(%arg0: i32) -> (i32, i32) {
    %c0_i32 = arith.constant 0 : i32
    %c0_i32_0 = arith.constant 0 : i32
    %c0_i32_1 = arith.constant 0 : i32
    return %c0_i32, %c0_i32_0 : i32, i32
  }
  func.func @transform_3(%arg0: i32) -> (i32, i32) {
    %c0_i32 = arith.constant 0 : i32
    %c0_i32_0 = arith.constant 0 : i32
    %c0_i32_1 = arith.constant 0 : i32
    return %c0_i32, %c0_i32_0 : i32, i32
  }
  func.func @transform_4(%arg0: i32) -> (i32, i32) {
    %c0_i32 = arith.constant 0 : i32
    %c0_i32_0 = arith.constant 0 : i32
    return %arg0, %c0_i32 : i32, i32
  }
}

</mosaic_0001>

<llo_original>
// kernel: bow_bilstm_forward.1
$region0: #{bow_bilstm_forward.1}
  #allocation0 [shape = 'u32[]', space=smem, size = 0x4, offset = 0x4, fixed_abs, tag = 'smem constant byte address 0x4 - core index']
  #allocation1 [shape = 'u32[144,128]{1,0:T(1,128)}', space=vmem, size = 0x12000, scoped, tag = 'internal scratch']
  %s0 = inlined_call_operand.vmem [shape: s32[8,8], index: 0, kind: input, shape index: {}]
  %s1 = inlined_call_operand.vmem [shape: f32[8,8], index: 1, kind: input, shape index: {}]
  %s2 = inlined_call_operand.hbm [shape: bf16[160,192], index: 2, kind: input, shape index: {}]
  %s3 = inlined_call_operand.vmem [shape: f32[8,192], index: 3, kind: input, shape index: {}]
  %s4 = inlined_call_operand.vmem [shape: f32[8,128], index: 4, kind: output, shape index: {}]
  %s5 = sld [smem:[#allocation0]]
  $region30: #{bow_bilstm_forward.1} parent=0
    _
  %s7 = ssub.s32 1, %s5
  %s8 = scalar_select 0, %s7, %s5
  $region1: #{bow_bilstm_forward.1} parent=0
    #allocation2 [shape = 'u8[81920]{0}', space=vmem, size = 0x14000, scoped, tag = 'input window, operand 2, single buffered']
    #allocation3 [shape = 's32[1]{0}', space=sflag, size = 0x4, scoped, tag = 'scoped memory for bow_bilstm_forward.1']
    %9 = vsyncpa [#allocation3], 0
    // Predicated region
    $region2: #{bow_bilstm_forward.1} parent=1 // pred_check
      _
    $region3: #{bow_bilstm_forward.1} parent=1 // pred_check_branch
      %11 = sbr.rel (0) target = $region5
    $region4: #{bow_bilstm_forward.1} parent=1 // pred_region
      _
    $region5: #{bow_bilstm_forward.1} parent=1 // pred_fallthru
      _
    // Predicated region
    $region6: #{bow_bilstm_forward.1} parent=1 // pred_check
      _
    $region7: #{bow_bilstm_forward.1} parent=1 // pred_check_branch
      %13 = sbr.rel (0) target = $region9
    $region8: #{bow_bilstm_forward.1} parent=1 // pred_region
      _
    $region9: #{bow_bilstm_forward.1} parent=1 // pred_fallthru
      _
    // Predicated region
    $region10: #{bow_bilstm_forward.1} parent=1 // pred_check
      _
    $region11: #{bow_bilstm_forward.1} parent=1 // pred_check_branch
      %15 = sbr.rel (0) target = $region13
    $region12: #{bow_bilstm_forward.1} parent=1 // pred_region
      %s17 = ssub.s32 2560, 2560
      %18 = vsyncadd [#allocation3], %s17
      %s19 = sshll.u32 [#allocation2], 4
      %s20 = int_to_ptr.vmem [resolvable:$true] %s19
      %25 = dma.hbm_to_vmem [thread:$0]  %s2, 2560, %s20, [#allocation3], 128, 128, 8
    $region13: #{bow_bilstm_forward.1} parent=1 // pred_fallthru
      _
    // Predicated region
    $region14: #{bow_bilstm_forward.1} parent=1 // pred_check
      _
    $region15: #{bow_bilstm_forward.1} parent=1 // pred_check_branch
      %27 = sbr.rel (0) target = $region17
    $region16: #{bow_bilstm_forward.1} parent=1 // pred_region
      _
    $region17: #{bow_bilstm_forward.1} parent=1 // pred_fallthru
      _
    // Predicated region
    $region18: #{bow_bilstm_forward.1} parent=1 // pred_check
      _
    $region19: #{bow_bilstm_forward.1} parent=1 // pred_check_branch
      %29 = sbr.rel (0) target = $region21
    $region20: #{bow_bilstm_forward.1} parent=1 // pred_region
      %30 = dma.done [#allocation3], 2560
    $region21: #{bow_bilstm_forward.1} parent=1 // pred_fallthru
      _
    %v32 = vld [vmem:[%s0] sm:$0xff]
    %v33 = vld [vmem:[%s1] sm:$0xff]
    %v34 = vlaneseq
    %v35 = vand.u32 %v34, 127
    %v36 = vlaneseq
    %v37 = vshrl.u32 %v36, 7
    %v38 = vsub.s32 0, %v37
    %v39 = vrot.slane %v32, %v38
    %41 = vbcast.lane.b32.xlu0 %v39, 256
    %v42 = vpop.permute.xlu0 %41
    %v43 = vlaneseq
    %v44 = vshrl.u32 %v43, 7
    %v45 = vsub.s32 1, %v44
    %v46 = vrot.slane %v32, %v45
    %48 = vbcast.lane.b32.xlu0 %v46, 256
    %v49 = vpop.permute.xlu0 %48
    %v50 = vlaneseq
    %v51 = vshrl.u32 %v50, 7
    %v52 = vsub.s32 2, %v51
    %v53 = vrot.slane %v32, %v52
    %55 = vbcast.lane.b32.xlu0 %v53, 256
    %v56 = vpop.permute.xlu0 %55
    %v57 = vlaneseq
    %v58 = vshrl.u32 %v57, 7
    %v59 = vsub.s32 3, %v58
    %v60 = vrot.slane %v32, %v59
    %62 = vbcast.lane.b32.xlu0 %v60, 256
    %v63 = vpop.permute.xlu0 %62
    %v64 = vlaneseq
    %v65 = vshrl.u32 %v64, 7
    %v66 = vsub.s32 4, %v65
    %v67 = vrot.slane %v32, %v66
    %69 = vbcast.lane.b32.xlu0 %v67, 256
    %v70 = vpop.permute.xlu0 %69
    %v71 = vlaneseq
    %v72 = vshrl.u32 %v71, 7
    %v73 = vsub.s32 5, %v72
    %v74 = vrot.slane %v32, %v73
    %76 = vbcast.lane.b32.xlu0 %v74, 256
    %v77 = vpop.permute.xlu0 %76
    %v78 = vlaneseq
    %v79 = vshrl.u32 %v78, 7
    %v80 = vsub.s32 6, %v79
    %v81 = vrot.slane %v32, %v80
    %83 = vbcast.lane.b32.xlu0 %v81, 256
    %v84 = vpop.permute.xlu0 %83
    %v85 = vlaneseq
    %v86 = vshrl.u32 %v85, 7
    %v87 = vsub.s32 7, %v86
    %v88 = vrot.slane %v32, %v87
    %90 = vbcast.lane.b32.xlu0 %v88, 256
    %v91 = vpop.permute.xlu0 %90
    %vm92 = vcmp.eq.s32.totalorder %v42, %v35
    %vm93 = vcmp.eq.s32.totalorder %v49, %v35
    %vm94 = vcmp.eq.s32.totalorder %v56, %v35
    %vm95 = vcmp.eq.s32.totalorder %v63, %v35
    %vm96 = vcmp.eq.s32.totalorder %v70, %v35
    %vm97 = vcmp.eq.s32.totalorder %v77, %v35
    %vm98 = vcmp.eq.s32.totalorder %v84, %v35
    %vm99 = vcmp.eq.s32.totalorder %v91, %v35
    %v100 = vlaneseq
    %v101 = vshrl.u32 %v100, 7
    %v102 = vsub.s32 0, %v101
    %v103 = vrot.slane %v33, %v102
    %105 = vbcast.lane.b32.xlu0 %v103, 256
    %v106 = vpop.permute.xlu0 %105
    %v107 = vlaneseq
    %v108 = vshrl.u32 %v107, 7
    %v109 = vsub.s32 1, %v108
    %v110 = vrot.slane %v33, %v109
    %112 = vbcast.lane.b32.xlu0 %v110, 256
    %v113 = vpop.permute.xlu0 %112
    %v114 = vlaneseq
    %v115 = vshrl.u32 %v114, 7
    %v116 = vsub.s32 2, %v115
    %v117 = vrot.slane %v33, %v116
    %119 = vbcast.lane.b32.xlu0 %v117, 256
    %v120 = vpop.permute.xlu0 %119
    %v121 = vlaneseq
    %v122 = vshrl.u32 %v121, 7
    %v123 = vsub.s32 3, %v122
    %v124 = vrot.slane %v33, %v123
    %126 = vbcast.lane.b32.xlu0 %v124, 256
    %v127 = vpop.permute.xlu0 %126
    %v128 = vlaneseq
    %v129 = vshrl.u32 %v128, 7
    %v130 = vsub.s32 4, %v129
    %v131 = vrot.slane %v33, %v130
    %133 = vbcast.lane.b32.xlu0 %v131, 256
    %v134 = vpop.permute.xlu0 %133
    %v135 = vlaneseq
    %v136 = vshrl.u32 %v135, 7
    %v137 = vsub.s32 5, %v136
    %v138 = vrot.slane %v33, %v137
    %140 = vbcast.lane.b32.xlu0 %v138, 256
    %v141 = vpop.permute.xlu0 %140
    %v142 = vlaneseq
    %v143 = vshrl.u32 %v142, 7
    %v144 = vsub.s32 6, %v143
    %v145 = vrot.slane %v33, %v144
    %147 = vbcast.lane.b32.xlu0 %v145, 256
    %v148 = vpop.permute.xlu0 %147
    %v149 = vlaneseq
    %v150 = vshrl.u32 %v149, 7
    %v151 = vsub.s32 7, %v150
    %v152 = vrot.slane %v33, %v151
    %154 = vbcast.lane.b32.xlu0 %v152, 256
    %v155 = vpop.permute.xlu0 %154
    %v156 = vsel %vm92, %v106, 0.0
    %v157 = vsel %vm93, %v113, 0.0
    %v158 = vsel %vm94, %v120, 0.0
    %v159 = vsel %vm95, %v127, 0.0
    %v160 = vsel %vm96, %v134, 0.0
    %v161 = vsel %vm97, %v141, 0.0
    %v162 = vsel %vm98, %v148, 0.0
    %v163 = vsel %vm99, %v155, 0.0
    %vm164 = vcmask 408576
    %v165 = vsel %vm164, %v156, 0.0
    %v166 = vrot.slane %v165, 4
    %v167 = vadd.f32 %v165, %v166
    %v168 = vrot.slane %v167, 2
    %v169 = vadd.f32 %v167, %v168
    %v170 = vrot.slane %v169, 1
    %v171 = vadd.f32 %v169, %v170
    %v172 = vsel %vm164, %v157, 0.0
    %v173 = vrot.slane %v172, 4
    %v174 = vadd.f32 %v172, %v173
    %v175 = vrot.slane %v174, 2
    %v176 = vadd.f32 %v174, %v175
    %v177 = vrot.slane %v176, 1
    %v178 = vadd.f32 %v176, %v177
    %v179 = vsel %vm164, %v158, 0.0
    %v180 = vrot.slane %v179, 4
    %v181 = vadd.f32 %v179, %v180
    %v182 = vrot.slane %v181, 2
    %v183 = vadd.f32 %v181, %v182
    %v184 = vrot.slane %v183, 1
    %v185 = vadd.f32 %v183, %v184
    %v186 = vsel %vm164, %v159, 0.0
    %v187 = vrot.slane %v186, 4
    %v188 = vadd.f32 %v186, %v187
    %v189 = vrot.slane %v188, 2
    %v190 = vadd.f32 %v188, %v189
    %v191 = vrot.slane %v190, 1
    %v192 = vadd.f32 %v190, %v191
    %v193 = vsel %vm164, %v160, 0.0
    %v194 = vrot.slane %v193, 4
    %v195 = vadd.f32 %v193, %v194
    %v196 = vrot.slane %v195, 2
    %v197 = vadd.f32 %v195, %v196
    %v198 = vrot.slane %v197, 1
    %v199 = vadd.f32 %v197, %v198
    %v200 = vsel %vm164, %v161, 0.0
    %v201 = vrot.slane %v200, 4
    %v202 = vadd.f32 %v200, %v201
    %v203 = vrot.slane %v202, 2
    %v204 = vadd.f32 %v202, %v203
    %v205 = vrot.slane %v204, 1
    %v206 = vadd.f32 %v204, %v205
    %v207 = vsel %vm164, %v162, 0.0
    %v208 = vrot.slane %v207, 4
    %v209 = vadd.f32 %v207, %v208
    %v210 = vrot.slane %v209, 2
    %v211 = vadd.f32 %v209, %v210
    %v212 = vrot.slane %v211, 1
    %v213 = vadd.f32 %v211, %v212
    %v214 = vsel %vm164, %v163, 0.0
    %v215 = vrot.slane %v214, 4
    %v216 = vadd.f32 %v214, %v215
    %v217 = vrot.slane %v216, 2
    %v218 = vadd.f32 %v216, %v217
    %v219 = vrot.slane %v218, 1
    %v220 = vadd.f32 %v218, %v219
    %v221 = vld [vmem:[#allocation2] sm:$0xff]
    %v222 = vld [vmem:[#allocation2 + $0x8] sm:$0xff]
    %v223 = vld [vmem:[#allocation2 + $0x10] sm:$0xff]
    %v224 = vld [vmem:[#allocation2 + $0x18] sm:$0xff]
    %v225 = vld [vmem:[#allocation2 + $0x20] sm:$0xff]
    %v226 = vld [vmem:[#allocation2 + $0x28] sm:$0xff]
    %v227 = vld [vmem:[#allocation2 + $0x30] sm:$0x11]
    %v228 = vld [vmem:[%s3] ss:$8 sm:$0x3]
    %v229 = vpack.c.bf16 %v171, %v171
    %v230 = vpack.c.bf16 %v178, %v178
    %v231 = vpack.c.bf16 %v185, %v185
    %v232 = vpack.c.bf16 %v192, %v192
    %v233 = vpack.c.bf16 %v199, %v199
    %v234 = vpack.c.bf16 %v206, %v206
    %v235 = vpack.c.bf16 %v213, %v213
    %v236 = vpack.c.bf16 %v220, %v220
    %v238 = vlaneseq
    %v239 = vshrl.u32 %v238, 7
    %v240 = vsub.s32 0, %v239
    %v241 = vrot.slane %v228, %v240
    %v242 = vlaneseq
    %v243 = vshrl.u32 %v242, 7
    %v244 = vsub.s32 1, %v243
    %v245 = vrot.slane %v228, %v244
    %v256 = vunpack.c.l.b16 %v229
    %v257 = vunpack.c.l.b16 %v230
    %v258 = vunpack.c.l.b16 %v231
    %v259 = vunpack.c.l.b16 %v232
    %v260 = vunpack.c.l.b16 %v233
    %v261 = vunpack.c.l.b16 %v234
    %v262 = vunpack.c.l.b16 %v235
    %v263 = vunpack.c.l.b16 %v236
    %vm264 = vcmask 1041409
    %v265 = vsel %vm264, %v257, %v256
    %vm266 = vcmask 1042434
    %v267 = vsel %vm266, %v258, %v265
    %vm268 = vcmask 1043459
    %v269 = vsel %vm268, %v259, %v267
    %vm270 = vcmask 1044484
    %v271 = vsel %vm270, %v260, %v269
    %vm272 = vcmask 1045509
    %v273 = vsel %vm272, %v261, %v271
    %vm274 = vcmask 1046534
    %v275 = vsel %vm274, %v262, %v273
    %vm276 = vcmask 1047559
    %v277 = vsel %vm276, %v263, %v275
    %v278 = vpack.c.b16 %v277, %v277
    %v286 = vunpack.c.l.b16 %v221
    %v287 = vunpack.c.h.b16 %v221
    %v288 = vunpack.c.l.b16 %v222
    %v289 = vunpack.c.h.b16 %v222
    %v290 = vunpack.c.l.b16 %v223
    %v291 = vunpack.c.h.b16 %v223
    %v292 = vunpack.c.l.b16 %v224
    %v293 = vunpack.c.h.b16 %v224
    %v294 = vunpack.c.l.b16 %v225
    %v295 = vunpack.c.h.b16 %v225
    %v296 = vunpack.c.l.b16 %v226
    %v297 = vunpack.c.h.b16 %v226
    %v298 = vunpack.c.l.b16 %v227
    %v299 = vunpack.c.h.b16 %v227
    %v300 = vpack.c.b16 %v288, %v286
    %v301 = vpack.c.b16 %v289, %v287
    %v302 = vpack.c.b16 %v292, %v290
    %v303 = vpack.c.b16 %v293, %v291
    %v304 = vpack.c.b16 %v296, %v294
    %v305 = vpack.c.b16 %v297, %v295
    %v306 = vpack.c.b16 %v298, %v298
    %v307 = vpack.c.b16 %v299, %v299
    %v315 = vsel %vm164, %v278, 0
    %vm317 = vcmask 1040384
    %v319 = vsel %vm317, %v306, 0
    %v322 = vsel %vm317, %v307, 0
    %324 = vmatprep.subr.bf16.mxu0 0
    %325 = vmatpush1.bf16.msra.mxu0 0
    %326 = vmatprep.subr.bf16.mxu0 0
    %327 = vmatpush1.bf16.msra.mxu0 0
    %328 = vmatprep.subr.bf16.mxu0 0
    %329 = vmatpush1.bf16.msra.mxu0 0
    %330 = vmatprep.subr.bf16.mxu0 0
    %331 = vmatpush1.bf16.msra.mxu0 0
    %332 = vmatprep.subr.bf16.mxu0 %v322
    %333 = vmatpush1.bf16.msra.mxu0 %v319
    %334 = vmatprep.subr.bf16.mxu0 %v305
    %335 = vmatpush1.bf16.msra.mxu0 %v304
    %336 = vmatprep.subr.bf16.mxu0 %v303
    %337 = vmatpush1.bf16.msra.mxu0 %v302
    %338 = vmatprep.subr.bf16.mxu0 %v301
    %339 = vmatpush1.bf16.msra.mxu0 %v300
    %340 = vmatprep.subr.bf16.mxu0 0
    %341 = vmatpush2.bf16.msra.mxu0 0
    %342 = vmatprep.subr.bf16.mxu0 0
    %343 = vmatpush2.bf16.msra.mxu0 0
    %344 = vmatprep.subr.bf16.mxu0 0
    %345 = vmatpush2.bf16.msra.mxu0 0
    %346 = vmatprep.subr.bf16.mxu0 0
    %347 = vmatpush2.bf16.msra.mxu0 0
    %348 = vmatprep.subr.bf16.mxu0 0
    %349 = vmatpush2.bf16.msra.mxu0 0
    %350 = vmatprep.subr.bf16.mxu0 0
    %351 = vmatpush2.bf16.msra.mxu0 0
    %352 = vmatprep.subr.bf16.mxu0 0
    %353 = vmatpush2.bf16.msra.mxu0 0
    %354 = vmatprep.subr.bf16.mxu0 0
    %355 = vmatpush2.bf16.msra.mxu0 0
    %356 = vmatprep.mubr.bf16.mxu0 0
    %357 = vmatmul.mubr.bf16.gmra.mxu0 %v315
    %v358 = vpop.f32.mrf.mxu0
    %v359 = vadd.f32 %v241, %v358
    %v360 = vpop.f32.mrf.mxu0
    %v361 = vadd.f32 %v245, %v360
    %v362 = vpop.f32.mrf.mxu0
    %v363 = vpop.f32.mrf.mxu0
    %364 = vdwg.mxu0
    %v365 = vxor.u32 %v359, 2147483648
    %v366 = vmul.f32 %v365, 1.442695
    %v367 = vpow.pop %v366
    %v368 = vadd.f32 %v367, 1.0
    %v369 = vrcp.pop %v368
    %v370 = vmul.f32 1.0, %v369
    %v371 = vtanh.pop %v359
    %v372 = vxor.u32 %v361, 2147483648
    %v373 = vmul.f32 %v372, 1.442695
    %v374 = vpow.pop %v373
    %v375 = vadd.f32 %v374, 1.0
    %v376 = vrcp.pop %v375
    %v377 = vmul.f32 1.0, %v376
    %379 = vrot.lane.b32.xlu0 %v371, 64
    %v380 = vpop.permute.xlu0 %379
    %v382 = vmul.f32 %v370, %v380
    %v383 = vtanh.pop %v382
    %v384 = vmul.f32 %v377, %v383
    %v385 = vld [vmem:[#allocation2 + $0x40] sm:$0xf]
    %v386 = vld [vmem:[#allocation2 + $0x48] sm:$0xf]
    %v387 = vld [vmem:[#allocation2 + $0x50] sm:$0xf]
    %v388 = vld [vmem:[#allocation2 + $0x58] sm:$0xf]
    %v389 = vld [vmem:[#allocation2 + $0x60] sm:$0xf]
    %v390 = vld [vmem:[#allocation2 + $0x68] sm:$0xf]
    %v391 = vld [vmem:[#allocation2 + $0x70] sm:$0xf]
    %v392 = vld [vmem:[#allocation2 + $0x78] sm:$0xf]
    %v393 = vld [vmem:[%s3 + $0x1] ss:$0 sm:$0xff]
    %v394 = vpack.c.bf16 %v384, %v384
    %v403 = vunpack.c.l.b16 %v385
    %v404 = vunpack.c.l.b16 %v386
    %v405 = vunpack.c.l.b16 %v387
    %v406 = vunpack.c.l.b16 %v388
    %v407 = vunpack.c.l.b16 %v389
    %v408 = vunpack.c.l.b16 %v390
    %v409 = vunpack.c.l.b16 %v391
    %v410 = vunpack.c.l.b16 %v392
    %v411 = vpack.c.b16 %v404, %v403
    %v412 = vpack.c.b16 %v406, %v405
    %v413 = vpack.c.b16 %v408, %v407
    %v414 = vpack.c.b16 %v410, %v409
    %vm419 = vcmask 523264
    %v421 = vsel %vm419, %v394, 0
    %423 = vmatprep.subr.bf16.mxu0 0
    %424 = vmatpush1.bf16.msra.mxu0 0
    %425 = vmatprep.subr.bf16.mxu0 0
    %426 = vmatpush1.bf16.msra.mxu0 0
    %427 = vmatprep.subr.bf16.mxu0 0
    %428 = vmatpush1.bf16.msra.mxu0 0
    %429 = vmatprep.subr.bf16.mxu0 0
    %430 = vmatpush1.bf16.msra.mxu0 0
    %431 = vmatprep.subr.bf16.mxu0 0
    %432 = vmatpush1.bf16.msra.mxu0 %v414
    %433 = vmatprep.subr.bf16.mxu0 0
    %434 = vmatpush1.bf16.msra.mxu0 %v413
    %435 = vmatprep.subr.bf16.mxu0 0
    %436 = vmatpush1.bf16.msra.mxu0 %v412
    %437 = vmatprep.subr.bf16.mxu0 0
    %438 = vmatpush1.bf16.msra.mxu0 %v411
    %439 = vmatprep.subr.bf16.mxu0 0
    %440 = vmatpush2.bf16.msra.mxu0 0
    %441 = vmatprep.subr.bf16.mxu0 0
    %442 = vmatpush2.bf16.msra.mxu0 0
    %443 = vmatprep.subr.bf16.mxu0 0
    %444 = vmatpush2.bf16.msra.mxu0 0
    %445 = vmatprep.subr.bf16.mxu0 0
    %446 = vmatpush2.bf16.msra.mxu0 0
    %447 = vmatprep.subr.bf16.mxu0 0
    %448 = vmatpush2.bf16.msra.mxu0 0
    %449 = vmatprep.subr.bf16.mxu0 0
    %450 = vmatpush2.bf16.msra.mxu0 0
    %451 = vmatprep.subr.bf16.mxu0 0
    %452 = vmatpush2.bf16.msra.mxu0 0
    %453 = vmatprep.subr.bf16.mxu0 0
    %454 = vmatpush2.bf16.msra.mxu0 0
    %455 = vmatprep.mubr.bf16.mxu0 0
    %456 = vmatmul.mubr.bf16.gmra.mxu0 %v421
    %v457 = vpop.f32.mrf.mxu0
    %v458 = vadd.f32 %v393, %v457
    %v459 = vpop.f32.mrf.mxu0
    %v460 = vpop.f32.mrf.mxu0
    %v461 = vpop.f32.mrf.mxu0
    %462 = vdwg.mxu0
    %v463 = vmax.f32 %v458, 0.0
    %v464 = vld [vmem:[#allocation2 + $0x80] sm:$0xf]
    %v465 = vld [vmem:[#allocation2 + $0x88] sm:$0xf]
    %v466 = vld [vmem:[#allocation2 + $0x90] sm:$0xf]
    %v467 = vld [vmem:[#allocation2 + $0x98] sm:$0xf]
    %v468 = vld [vmem:[%s3 + $0x2] ss:$0 sm:$0xff]
    %v469 = vpack.c.bf16 %v463, %v463
    %v474 = vunpack.c.l.b16 %v464
    %v475 = vunpack.c.l.b16 %v465
    %v476 = vunpack.c.l.b16 %v466
    %v477 = vunpack.c.l.b16 %v467
    %v478 = vpack.c.b16 %v475, %v474
    %v479 = vpack.c.b16 %v477, %v476
    %vm482 = vcmask 261120
    %v484 = vsel %vm482, %v469, 0
    %486 = vmatprep.subr.bf16.mxu0 0
    %487 = vmatpush1.bf16.msra.mxu0 0
    %488 = vmatprep.subr.bf16.mxu0 0
    %489 = vmatpush1.bf16.msra.mxu0 0
    %490 = vmatprep.subr.bf16.mxu0 0
    %491 = vmatpush1.bf16.msra.mxu0 0
    %492 = vmatprep.subr.bf16.mxu0 0
    %493 = vmatpush1.bf16.msra.mxu0 0
    %494 = vmatprep.subr.bf16.mxu0 0
    %495 = vmatpush1.bf16.msra.mxu0 0
    %496 = vmatprep.subr.bf16.mxu0 0
    %497 = vmatpush1.bf16.msra.mxu0 0
    %498 = vmatprep.subr.bf16.mxu0 0
    %499 = vmatpush1.bf16.msra.mxu0 %v479
    %500 = vmatprep.subr.bf16.mxu0 0
    %501 = vmatpush1.bf16.msra.mxu0 %v478
    %502 = vmatprep.subr.bf16.mxu0 0
    %503 = vmatpush2.bf16.msra.mxu0 0
    %504 = vmatprep.subr.bf16.mxu0 0
    %505 = vmatpush2.bf16.msra.mxu0 0
    %506 = vmatprep.subr.bf16.mxu0 0
    %507 = vmatpush2.bf16.msra.mxu0 0
    %508 = vmatprep.subr.bf16.mxu0 0
    %509 = vmatpush2.bf16.msra.mxu0 0
    %510 = vmatprep.subr.bf16.mxu0 0
    %511 = vmatpush2.bf16.msra.mxu0 0
    %512 = vmatprep.subr.bf16.mxu0 0
    %513 = vmatpush2.bf16.msra.mxu0 0
    %514 = vmatprep.subr.bf16.mxu0 0
    %515 = vmatpush2.bf16.msra.mxu0 0
    %516 = vmatprep.subr.bf16.mxu0 0
    %517 = vmatpush2.bf16.msra.mxu0 0
    %518 = vmatprep.mubr.bf16.mxu0 0
    %519 = vmatmul.mubr.bf16.gmra.mxu0 %v484
    %v520 = vpop.f32.mrf.mxu0
    %v521 = vadd.f32 %v468, %v520
    %v522 = vpop.f32.mrf.mxu0
    %v523 = vpop.f32.mrf.mxu0
    %v524 = vpop.f32.mrf.mxu0
    %525 = vdwg.mxu0
    %526 = vmax.xlane.f32.xlu0 %v521
    %v527 = vpop.xlane.xlu0 %526
    %v528 = vsub.f32 %v521, %v527
    %v529 = vmul.f32 %v528, 1.442695
    %v530 = vpow.pop %v529
    %531 = vadd.xlane.f32.xlu0 %v530
    %v532 = vpop.xlane.xlu0 %531
    %v533 = vlog2.pop %v532
    %v534 = vmul.f32 %v533, 0.6931472
    %v535 = vadd.f32 %v534, %v527
    %v536 = vsub.f32 %v521, %v535
    %537 = vst [vmem:[%s4] sm:$0xff] %v536
    // Predicated region
    $region22: #{bow_bilstm_forward.1} parent=1 // pred_check
      _
    $region23: #{bow_bilstm_forward.1} parent=1 // pred_check_branch
      %539 = sbr.rel (0) target = $region25
    $region24: #{bow_bilstm_forward.1} parent=1 // pred_region
      _
    $region25: #{bow_bilstm_forward.1} parent=1 // pred_fallthru
      _
    // Predicated region
    $region26: #{bow_bilstm_forward.1} parent=1 // pred_check
      _
    $region27: #{bow_bilstm_forward.1} parent=1 // pred_check_branch
      %541 = sbr.rel (0) target = $region29
    $region28: #{bow_bilstm_forward.1} parent=1 // pred_region
      _
    $region29: #{bow_bilstm_forward.1} parent=1 // pred_fallthru
      _
    %542 = vsyncpa [#allocation3], 1

</llo_original>
